<compile_context>
chip_gen: v7x
topology: tpu7x:2x2x1
jax: 0.10.0
libtpu: 0.0.40
codegen_flags: <defaults>
</compile_context>

<pallas_src>
import functools

import jax
import jax.numpy as jnp
from jax.experimental import pallas as pl
from jax.experimental.pallas import tpu as pltpu

C_IN = 26     # protein encoding channels (fixed by the module)
C_PAD = 32    # channel pad so 4 positions x 32 channels == 128 lanes (one vreg row)
C_OUT = 32    # first (and only) conv filter count
KSIZE = 4     # first conv kernel size
FC_OUT = 256


def cnn_kernel(x_ref, wt_ref, wb_ref, mask_ref, bc_ref, wf_ref, bf_ref, o_ref, *, l4):
    # x_ref   : (TB, l4+1, 128) bf16   row j = positions 4j..4j+3, 32 channels each
    # wt_ref  : (128, 128)      bf16   polyphase conv weights, "current row" half
    # wb_ref  : (128, 128)      bf16   polyphase conv weights, "next row" half
    # mask_ref: (1, l4, 128)    f32    0 on valid output positions, -1e30 on compute padding
    # bc_ref  : (1, 32)         f32    conv bias (applied AFTER the max-pool)
    # wf_ref  : (32, 256)       f32    fc1 weight (transposed)
    # bf_ref  : (1, 256)        f32    fc1 bias
    # o_ref   : (TB, 256)       f32
    tb = x_ref.shape[0]

    # a[j] = positions 4j..4j+3 (aligned), b[j] = positions 4j+4..4j+7 (one-row-offset load).
    a = x_ref[:, 0:l4, :].reshape(tb * l4, KSIZE * C_PAD)
    b = x_ref[:, 1:l4 + 1, :].reshape(tb * l4, KSIZE * C_PAD)

    # Raw conv outputs for all 4 phases at once: acc[., 32*r + o] = conv_raw(4j + r, o).
    # Two K=128 matmuls (instead of one K=256) avoid materialising a lane-concat operand.
    acc = jnp.dot(a, wt_ref[...], preferred_element_type=jnp.float32)
    acc = acc + jnp.dot(b, wb_ref[...], preferred_element_type=jnp.float32)

    # Kill padded / out-of-range output positions, then adaptive_max_pool1d(1) over L.
    acc = acc.reshape(tb, l4, KSIZE * C_OUT) + mask_ref[...]
    pooled = jnp.max(acc, axis=1)                                            # (TB, 128)
    pooled = jnp.maximum(jnp.maximum(pooled[:, 0:32], pooled[:, 32:64]),
                         jnp.maximum(pooled[:, 64:96], pooled[:, 96:128]))   # fold phases

    # Deferred conv bias + ReLU: max_p relu(z_p + b) == relu(max_p z_p + b).  Then fc1.
    z = jnp.maximum(pooled + bc_ref[...], 0.0)                               # (TB, 32)
    o_ref[...] = (jnp.dot(z, wf_ref[...], preferred_element_type=jnp.float32)
                  + bf_ref[...]).astype(o_ref.dtype)


def _round_up(x, m):
    return (x + m - 1) // m * m


@functools.partial(jax.jit, static_argnames=("tb_max",))
def cnn_forward(v_ncl, conv_w, conv_b, fc_w, fc_b, *, tb_max=128):
    """v_ncl: (B, 26, L) like the PyTorch module.  Returns (B, 256) float32."""
    B, C, L = v_ncl.shape
    assert C == C_IN and L >= KSIZE
    lout = L - KSIZE + 1                  # true conv output length
    n_out = _round_up(lout, 4 * 8)        # computed output positions (l4 multiple of 8)
    l4 = n_out // 4
    L_pad = n_out + 4                     # input positions needed: 4*l4 + 4 (the "next row")

    # ---- batch tiling from a conservative VMEM budget --------------------------------------
    # per-row estimate: x tile (double-buffered bf16) + a/b loads + ~3 f32-sized temps.
    bytes_per_row = (l4 + 1) * 128 * (2 * 2 + 2 + 2 + 3 * 4)
    vmem_budget = 30 * 1024 * 1024
    tb = max(8, min(tb_max, (vmem_budget // bytes_per_row) // 8 * 8))
    if B > tb:
        b_pad = _round_up(B, tb)
    elif B >= 16:                         # split small batches into 2 tiles (v7x dual-TC)
        tb = _round_up(B, 16) // 2
        b_pad = 2 * tb
    elif B > 8:
        tb = b_pad = _round_up(B, 8)
    else:
        tb = b_pad = B
    grid = (b_pad // tb,)

    # ---- activations: transpose + channel-pad + bf16 cast, then a FREE 4-position reshape --
    x = jnp.transpose(v_ncl, (0, 2, 1)).astype(jnp.bfloat16)                 # (B, L, 26)
    x = jnp.pad(x, ((0, b_pad - B), (0, L_pad - L), (0, C_PAD - C_IN)))      # (B_pad, L_pad, 32)
    x4 = x.reshape(b_pad, L_pad // 4, KSIZE * C_PAD)                         # (B_pad, l4+1, 128)

    # ---- polyphase conv weights: conv_raw[4j+r, o] = a[j] @ wt[:, 32r+o] + b[j] @ wb[:, 32r+o]
    wk = jnp.transpose(conv_w, (2, 1, 0))                                    # wk[k, c, o]
    wk = jnp.pad(wk, ((0, 0), (0, C_PAD - C_IN), (0, 0)))                    # (4, 32, 32)
    zero = jnp.zeros((C_PAD, C_OUT), wk.dtype)
    wt = jnp.block([[wk[m - r] if m >= r else zero for r in range(KSIZE)]
                    for m in range(KSIZE)]).astype(jnp.bfloat16)             # (128, 128)
    wb = jnp.block([[wk[m + KSIZE - r] if r > m else zero for r in range(KSIZE)]
                    for m in range(KSIZE)]).astype(jnp.bfloat16)             # (128, 128)

    # additive mask: 0 on the lout valid output positions, -1e30 on compute padding.
    pos = (4 * jnp.arange(l4, dtype=jnp.int32)[:, None]
           + jnp.arange(KSIZE * C_OUT, dtype=jnp.int32)[None, :] // C_OUT)
    mask = jnp.where(pos < lout, 0.0, -1e30).astype(jnp.float32)[None]       # (1, l4, 128)

    bc = conv_b.reshape(1, C_OUT).astype(jnp.float32)
    wf = jnp.transpose(fc_w, (1, 0)).astype(jnp.float32)                     # (32, 256)
    bf = fc_b.reshape(1, FC_OUT).astype(jnp.float32)

    out = pl.pallas_call(
        functools.partial(cnn_kernel, l4=l4),
        out_shape=jax.ShapeDtypeStruct((b_pad, FC_OUT), jnp.float32),
        grid_spec=pltpu.PrefetchScalarGridSpec(
            num_scalar_prefetch=0,
            grid=grid,
            in_specs=[
                pl.BlockSpec((tb, l4 + 1, KSIZE * C_PAD), lambda i: (i, 0, 0)),
                # Small weights / tables: constant index maps -> VMEM-resident, no re-DMA.
                pl.BlockSpec((KSIZE * C_PAD, KSIZE * C_OUT), lambda i: (0, 0)),
                pl.BlockSpec((KSIZE * C_PAD, KSIZE * C_OUT), lambda i: (0, 0)),
                pl.BlockSpec((1, l4, KSIZE * C_OUT), lambda i: (0, 0, 0)),
                pl.BlockSpec((1, C_OUT), lambda i: (0, 0)),
                pl.BlockSpec((C_OUT, FC_OUT), lambda i: (0, 0)),
                pl.BlockSpec((1, FC_OUT), lambda i: (0, 0)),
            ],
            out_specs=pl.BlockSpec((tb, FC_OUT), lambda i: (i, 0)),
        ),
        compiler_params=pltpu.CompilerParams(
            dimension_semantics=("parallel",),
            vmem_limit_bytes=48 * 1024 * 1024,
        ),
    )(x4, wt, wb, mask, bc, wf, bf)
    return out[:B]


if __name__ == "__main__":
    key = jax.random.PRNGKey(0)
    k_x, k_cw, k_cb, k_fw, k_fb = jax.random.split(key, 5)

    B, L = 2, 64
    # Deterministic synthetic parameters (PyTorch shapes):
    #   conv.weight: (32, 26, 4), conv.bias: (32,)
    #   fc1.weight : (256, 32),   fc1.bias : (256,)
    x = jax.random.normal(k_x, (B, C_IN, L), jnp.float32)
    conv_w = 0.1 * jax.random.normal(k_cw, (C_OUT, C_IN, KSIZE), jnp.float32)
    conv_b = 0.1 * jax.random.normal(k_cb, (C_OUT,), jnp.float32)
    fc_w = 0.1 * jax.random.normal(k_fw, (FC_OUT, C_OUT), jnp.float32)
    fc_b = 0.1 * jax.random.normal(k_fb, (FC_OUT,), jnp.float32)

    out = cnn_forward(x, conv_w, conv_b, fc_w, fc_b)
    jax.block_until_ready(out)
    assert out.shape == (B, FC_OUT) and out.dtype == jnp.float32

    # Plain-JAX reference of the same forward.
    def ref(v, cast_bf16):
        xb = jnp.transpose(v, (0, 2, 1)).astype(jnp.float32)
        lo = L - KSIZE + 1
        cw = conv_w
        if cast_bf16:  # match the kernel's bf16-input / f32-accumulate precision
            xb = xb.astype(jnp.bfloat16)
            cw = conv_w.astype(jnp.bfloat16)
        acc = jnp.zeros((B, lo, C_OUT), jnp.float32)
        for k in range(KSIZE):
            acc = acc + jnp.einsum("blc,oc->blo", xb[:, k:k + lo, :], cw[:, :, k],
                                   preferred_element_type=jnp.float32)
        acc = jnp.maximum(acc + conv_b[None, None, :], 0.0)
        pooled = jnp.max(acc, axis=1)
        return pooled @ fc_w.T + fc_b[None, :]

    # Tight check vs a precision-matched (bf16-input, f32-accum) reference ...
    assert jnp.allclose(out, ref(x, True), atol=1e-3, rtol=1e-3)
    # ... and a coarser check vs the full-f32 reference (bf16 rounding only).
    assert jnp.allclose(out, ref(x, False), atol=5e-2, rtol=5e-2)
    print("KERNEL_OK")
</pallas_src>

<mosaic_0001>
module attributes {stable_mosaic.version = 11 : i64} {
  func.func @cnn_kernel(%arg0: i32, %arg1: memref<2x17x128xbf16, #tpu.memory_space<vmem>>, %arg2: memref<128x128xbf16, #tpu.memory_space<vmem>>, %arg3: memref<128x128xbf16, #tpu.memory_space<vmem>>, %arg4: memref<1x16x128xf32, #tpu.memory_space<vmem>>, %arg5: memref<1x32xf32, #tpu.memory_space<vmem>>, %arg6: memref<32x256xf32, #tpu.memory_space<vmem>>, %arg7: memref<1x256xf32, #tpu.memory_space<vmem>>, %arg8: memref<2x256xf32, #tpu.memory_space<vmem>>) attributes {dimension_semantics = [#tpu.dimension_semantics<parallel>], iteration_bounds = array<i64: 1>, scalar_prefetch = 0 : i64, scratch_operands = 0 : i64, tpu.core_type = #tpu.core_type<tc>, window_params = [{transform_indices = @transform_0, window_bounds = array<i64: 2, 17, 128>}, {pipeline_mode = #tpu.pipeline_mode<synchronous>, transform_indices = @transform_1, window_bounds = array<i64: 128, 128>}, {pipeline_mode = #tpu.pipeline_mode<synchronous>, transform_indices = @transform_2, window_bounds = array<i64: 128, 128>}, {pipeline_mode = #tpu.pipeline_mode<synchronous>, transform_indices = @transform_3, window_bounds = array<i64: 1, 16, 128>}, {pipeline_mode = #tpu.pipeline_mode<synchronous>, transform_indices = @transform_4, window_bounds = array<i64: 1, 32>}, {pipeline_mode = #tpu.pipeline_mode<synchronous>, transform_indices = @transform_5, window_bounds = array<i64: 32, 256>}, {pipeline_mode = #tpu.pipeline_mode<synchronous>, transform_indices = @transform_6, window_bounds = array<i64: 1, 256>}, {transform_indices = @transform_7, window_bounds = array<i64: 2, 256>}]} {
    %c0 = arith.constant 0 : index
    %c0_0 = arith.constant 0 : index
    %c0_1 = arith.constant 0 : index
    %0 = vector.load %arg1[%c0, %c0_0, %c0_1] : memref<2x17x128xbf16, #tpu.memory_space<vmem>>, vector<2x16x128xbf16>
    %1 = vector.shape_cast %0 : vector<2x16x128xbf16> to vector<32x128xbf16>
    %c0_2 = arith.constant 0 : index
    %c1 = arith.constant 1 : index
    %c0_3 = arith.constant 0 : index
    %2 = vector.load %arg1[%c0_2, %c1, %c0_3] : memref<2x17x128xbf16, #tpu.memory_space<vmem>>, vector<2x16x128xbf16>
    %3 = vector.shape_cast %2 : vector<2x16x128xbf16> to vector<32x128xbf16>
    %c0_4 = arith.constant 0 : index
    %c0_5 = arith.constant 0 : index
    %4 = vector.load %arg2[%c0_4, %c0_5] : memref<128x128xbf16, #tpu.memory_space<vmem>>, vector<128x128xbf16>
    %cst = arith.constant dense<0.000000e+00> : vector<32x128xf32>
    %5 = tpu.matmul %1, %4, %cst {dimension_numbers = #tpu.dot_dimension_numbers<[1], [0], [0], [1], [0, 0, 1, 1], [], []>} : vector<32x128xbf16>, vector<128x128xbf16>, vector<32x128xf32> -> vector<32x128xf32>
    %c0_6 = arith.constant 0 : index
    %c0_7 = arith.constant 0 : index
    %6 = vector.load %arg3[%c0_6, %c0_7] : memref<128x128xbf16, #tpu.memory_space<vmem>>, vector<128x128xbf16>
    %cst_8 = arith.constant dense<0.000000e+00> : vector<32x128xf32>
    %7 = tpu.matmul %3, %6, %cst_8 {dimension_numbers = #tpu.dot_dimension_numbers<[1], [0], [0], [1], [0, 0, 1, 1], [], []>} : vector<32x128xbf16>, vector<128x128xbf16>, vector<32x128xf32> -> vector<32x128xf32>
    %8 = arith.addf %5, %7 : vector<32x128xf32>
    %9 = vector.shape_cast %8 : vector<32x128xf32> to vector<2x16x128xf32>
    %c0_9 = arith.constant 0 : index
    %c0_10 = arith.constant 0 : index
    %c0_11 = arith.constant 0 : index
    %10 = vector.load %arg4[%c0_9, %c0_10, %c0_11] : memref<1x16x128xf32, #tpu.memory_space<vmem>>, vector<1x16x128xf32>
    %11 = vector.broadcast %10 : vector<1x16x128xf32> to vector<2x16x128xf32>
    %12 = arith.addf %9, %11 : vector<2x16x128xf32>
    %cst_12 = arith.constant dense<0xFF800000> : vector<2x128xf32>
    %13 = vector.multi_reduction <maximumf>, %12, %cst_12 [1] : vector<2x16x128xf32> to vector<2x128xf32>
    %14 = vector.extract_strided_slice %13 {offsets = [0, 0], sizes = [2, 32], strides = [1, 1]} : vector<2x128xf32> to vector<2x32xf32>
    %15 = vector.extract_strided_slice %13 {offsets = [0, 32], sizes = [2, 32], strides = [1, 1]} : vector<2x128xf32> to vector<2x32xf32>
    %16 = arith.maximumf %14, %15 : vector<2x32xf32>
    %17 = vector.extract_strided_slice %13 {offsets = [0, 64], sizes = [2, 32], strides = [1, 1]} : vector<2x128xf32> to vector<2x32xf32>
    %18 = vector.extract_strided_slice %13 {offsets = [0, 96], sizes = [2, 32], strides = [1, 1]} : vector<2x128xf32> to vector<2x32xf32>
    %19 = arith.maximumf %17, %18 : vector<2x32xf32>
    %20 = arith.maximumf %16, %19 : vector<2x32xf32>
    %c0_13 = arith.constant 0 : index
    %c0_14 = arith.constant 0 : index
    %21 = vector.load %arg5[%c0_13, %c0_14] : memref<1x32xf32, #tpu.memory_space<vmem>>, vector<1x32xf32>
    %22 = vector.broadcast %21 : vector<1x32xf32> to vector<2x32xf32>
    %23 = arith.addf %20, %22 : vector<2x32xf32>
    %cst_15 = arith.constant 0.000000e+00 : f32
    %24 = vector.broadcast %cst_15 : f32 to vector<2x32xf32>
    %25 = arith.maximumf %23, %24 : vector<2x32xf32>
    %c0_16 = arith.constant 0 : index
    %c0_17 = arith.constant 0 : index
    %26 = vector.load %arg6[%c0_16, %c0_17] : memref<32x256xf32, #tpu.memory_space<vmem>>, vector<32x256xf32>
    %cst_18 = arith.constant dense<0.000000e+00> : vector<2x256xf32>
    %27 = tpu.matmul %25, %26, %cst_18 {dimension_numbers = #tpu.dot_dimension_numbers<[1], [0], [0], [1], [0, 0, 1, 1], [], []>} : vector<2x32xf32>, vector<32x256xf32>, vector<2x256xf32> -> vector<2x256xf32>
    %c0_19 = arith.constant 0 : index
    %c0_20 = arith.constant 0 : index
    %28 = vector.load %arg7[%c0_19, %c0_20] : memref<1x256xf32, #tpu.memory_space<vmem>>, vector<1x256xf32>
    %29 = vector.broadcast %28 : vector<1x256xf32> to vector<2x256xf32>
    %30 = arith.addf %27, %29 : vector<2x256xf32>
    %c0_21 = arith.constant 0 : index
    %c0_22 = arith.constant 0 : index
    %31 = vector.load %arg8[%c0_21, %c0_22] : memref<2x256xf32, #tpu.memory_space<vmem>>, vector<2x256xf32>
    tpu.vector_store %arg8[%c0_21, %c0_22], %30 {strides = array<i32>} : memref<2x256xf32, #tpu.memory_space<vmem>>, vector<2x256xf32>,
    return
  }
  func.func @transform_0(%arg0: i32) -> (i32, i32, i32) {
    %c0_i32 = arith.constant 0 : i32
    %c0_i32_0 = arith.constant 0 : i32
    %c0_i32_1 = arith.constant 0 : i32
    return %arg0, %c0_i32, %c0_i32_0 : i32, i32, i32
  }
  func.func @transform_1(%arg0: i32) -> (i32, i32) {
    %c0_i32 = arith.constant 0 : i32
    %c0_i32_0 = arith.constant 0 : i32
    %c0_i32_1 = arith.constant 0 : i32
    return %c0_i32, %c0_i32_0 : i32, i32
  }
  func.func @transform_2(%arg0: i32) -> (i32, i32) {
    %c0_i32 = arith.constant 0 : i32
    %c0_i32_0 = arith.constant 0 : i32
    %c0_i32_1 = arith.constant 0 : i32
    return %c0_i32, %c0_i32_0 : i32, i32
  }
  func.func @transform_3(%arg0: i32) -> (i32, i32, i32) {
    %c0_i32 = arith.constant 0 : i32
    %c0_i32_0 = arith.constant 0 : i32
    %c0_i32_1 = arith.constant 0 : i32
    %c0_i32_2 = arith.constant 0 : i32
    return %c0_i32, %c0_i32_0, %c0_i32_1 : i32, i32, i32
  }
  func.func @transform_4(%arg0: i32) -> (i32, i32) {
    %c0_i32 = arith.constant 0 : i32
    %c0_i32_0 = arith.constant 0 : i32
    %c0_i32_1 = arith.constant 0 : i32
    return %c0_i32, %c0_i32_0 : i32, i32
  }
  func.func @transform_5(%arg0: i32) -> (i32, i32) {
    %c0_i32 = arith.constant 0 : i32
    %c0_i32_0 = arith.constant 0 : i32
    %c0_i32_1 = arith.constant 0 : i32
    return %c0_i32, %c0_i32_0 : i32, i32
  }
  func.func @transform_6(%arg0: i32) -> (i32, i32) {
    %c0_i32 = arith.constant 0 : i32
    %c0_i32_0 = arith.constant 0 : i32
    %c0_i32_1 = arith.constant 0 : i32
    return %c0_i32, %c0_i32_0 : i32, i32
  }
  func.func @transform_7(%arg0: i32) -> (i32, i32) {
    %c0_i32 = arith.constant 0 : i32
    %c0_i32_0 = arith.constant 0 : i32
    return %arg0, %c0_i32 : i32, i32
  }
}

</mosaic_0001>

<llo_original>
// kernel: cnn_forward.1
$region0: #{cnn_forward.1}
  #allocation0 [shape = 'u32[]', space=smem, size = 0x4, offset = 0x4, fixed_abs, tag = 'smem constant byte address 0x4 - core index']
  #allocation1 [shape = 'u32[144,128]{1,0:T(1,128)}', space=vmem, size = 0x12000, scoped, tag = 'internal scratch']
  %s0 = inlined_call_operand.vmem [shape: bf16[2,17,128], index: 0, kind: input, shape index: {}]
  %s1 = inlined_call_operand.vmem [shape: bf16[128,128], index: 1, kind: input, shape index: {}]
  %s2 = inlined_call_operand.vmem [shape: bf16[128,128], index: 2, kind: input, shape index: {}]
  %s3 = inlined_call_operand.vmem [shape: f32[1,16,128], index: 3, kind: input, shape index: {}]
  %s4 = inlined_call_operand.vmem [shape: f32[1,32], index: 4, kind: input, shape index: {}]
  %s5 = inlined_call_operand.vmem [shape: f32[32,256], index: 5, kind: input, shape index: {}]
  %s6 = inlined_call_operand.vmem [shape: f32[1,256], index: 6, kind: input, shape index: {}]
  %s7 = inlined_call_operand.hbm [shape: f32[2,256], index: 7, kind: output, shape index: {}]
  %s8 = sld [smem:[#allocation0]]
  $region38: #{cnn_forward.1} parent=0
    _
  %s10 = ssub.s32 1, %s8
  %s11 = scalar_select 0, %s10, %s8
  $region1: #{cnn_forward.1} parent=0
    #allocation2 [shape = 'u8[2048]{0}', space=vmem, size = 0x800, scoped, tag = 'output window, operand 0, single buffered']
    #allocation3 [shape = 's32[1]{0}', space=sflag, size = 0x4, scoped, tag = 'scoped memory for cnn_forward.1']
    %12 = vsyncpa [#allocation3], 0
    // Predicated region
    $region2: #{cnn_forward.1} parent=1 // pred_check
      _
    $region3: #{cnn_forward.1} parent=1 // pred_check_branch
      %14 = sbr.rel (0) target = $region5
    $region4: #{cnn_forward.1} parent=1 // pred_region
      _
    $region5: #{cnn_forward.1} parent=1 // pred_fallthru
      _
    // Predicated region
    $region6: #{cnn_forward.1} parent=1 // pred_check
      _
    $region7: #{cnn_forward.1} parent=1 // pred_check_branch
      %16 = sbr.rel (0) target = $region9
    $region8: #{cnn_forward.1} parent=1 // pred_region
      _
    $region9: #{cnn_forward.1} parent=1 // pred_fallthru
      _
    // Predicated region
    $region10: #{cnn_forward.1} parent=1 // pred_check
      _
    $region11: #{cnn_forward.1} parent=1 // pred_check_branch
      %18 = sbr.rel (0) target = $region13
    $region12: #{cnn_forward.1} parent=1 // pred_region
      _
    $region13: #{cnn_forward.1} parent=1 // pred_fallthru
      _
    // Predicated region
    $region14: #{cnn_forward.1} parent=1 // pred_check
      _
    $region15: #{cnn_forward.1} parent=1 // pred_check_branch
      %20 = sbr.rel (0) target = $region17
    $region16: #{cnn_forward.1} parent=1 // pred_region
      _
    $region17: #{cnn_forward.1} parent=1 // pred_fallthru
      _
    // Predicated region
    $region18: #{cnn_forward.1} parent=1 // pred_check
      _
    $region19: #{cnn_forward.1} parent=1 // pred_check_branch
      %22 = sbr.rel (0) target = $region21
    $region20: #{cnn_forward.1} parent=1 // pred_region
      _
    $region21: #{cnn_forward.1} parent=1 // pred_fallthru
      _
    // Predicated region
    $region22: #{cnn_forward.1} parent=1 // pred_check
      _
    $region23: #{cnn_forward.1} parent=1 // pred_check_branch
      %24 = sbr.rel (0) target = $region25
    $region24: #{cnn_forward.1} parent=1 // pred_region
      _
    $region25: #{cnn_forward.1} parent=1 // pred_fallthru
      _
    // Predicated region
    $region26: #{cnn_forward.1} parent=1 // pred_check
      _
    $region27: #{cnn_forward.1} parent=1 // pred_check_branch
      %26 = sbr.rel (0) target = $region29
    $region28: #{cnn_forward.1} parent=1 // pred_region
      _
    $region29: #{cnn_forward.1} parent=1 // pred_fallthru
      _
    %v28 = vld [vmem:[%s0] sm:$0xf]
    %v29 = vld [vmem:[%s0 + $0x4] sm:$0xf]
    %v30 = vld [vmem:[%s0 + $0xc] sm:$0xf]
    %v31 = vld [vmem:[%s0 + $0x10] sm:$0xf]
    %v32 = vld [vmem:[%s0 + $0x8] sm:$0x1]
    %v33 = vld [vmem:[%s0 + $0x14] sm:$0x1]
    %vm34 = vsmask.f32 3328
    %vm35 = vsmask.f32 7440
    %vm36 = vmor %vm34, %vm35
    %v38 = vshrl.u32 %v28, 16
    %v40 = vrot.slane %v38, 4
    %v41 = vshll.u32 %v28, 16
    %v43 = vrot.slane %v41, 5
    %v44 = vor.u32 %v40, %v43
    %v45 = vrot.slane %v44, 4
    %v47 = vshll.u32 %v29, 16
    %v49 = vrot.slane %v47, 5
    %v50 = vsel %vm36, %v45, %v49
    %v51 = vshrl.u32 %v29, 16
    %v53 = vrot.slane %v51, 4
    %v54 = vor.u32 %v53, %v49
    %v55 = vrot.slane %v54, 4
    %v57 = vshll.u32 %v32, 16
    %v59 = vrot.slane %v57, 5
    %v60 = vsel %vm36, %v55, %v59
    %v62 = vshrl.u32 %v30, 16
    %v64 = vrot.slane %v62, 4
    %v65 = vshll.u32 %v30, 16
    %v67 = vrot.slane %v65, 5
    %v68 = vor.u32 %v64, %v67
    %v69 = vrot.slane %v68, 4
    %v71 = vshll.u32 %v31, 16
    %v73 = vrot.slane %v71, 5
    %v74 = vsel %vm36, %v69, %v73
    %v75 = vshrl.u32 %v31, 16
    %v77 = vrot.slane %v75, 4
    %v78 = vor.u32 %v77, %v73
    %v79 = vrot.slane %v78, 4
    %v81 = vshll.u32 %v33, 16
    %v83 = vrot.slane %v81, 5
    %v84 = vsel %vm36, %v79, %v83
    %v85 = vld [vmem:[%s1] sm:$0xf]
    %v86 = vld [vmem:[%s1 + $0x4] sm:$0xf]
    %v87 = vld [vmem:[%s1 + $0x8] sm:$0xf]
    %v88 = vld [vmem:[%s1 + $0xc] sm:$0xf]
    %v89 = vld [vmem:[%s1 + $0x10] sm:$0xf]
    %v90 = vld [vmem:[%s1 + $0x14] sm:$0xf]
    %v91 = vld [vmem:[%s1 + $0x18] sm:$0xf]
    %v92 = vld [vmem:[%s1 + $0x1c] sm:$0xf]
    %v93 = vld [vmem:[%s1 + $0x20] sm:$0xf]
    %v94 = vld [vmem:[%s1 + $0x24] sm:$0xf]
    %v95 = vld [vmem:[%s1 + $0x28] sm:$0xf]
    %v96 = vld [vmem:[%s1 + $0x2c] sm:$0xf]
    %v97 = vld [vmem:[%s1 + $0x30] sm:$0xf]
    %v98 = vld [vmem:[%s1 + $0x34] sm:$0xf]
    %v99 = vld [vmem:[%s1 + $0x38] sm:$0xf]
    %v100 = vld [vmem:[%s1 + $0x3c] sm:$0xf]
    %v101 = vld [vmem:[%s2] sm:$0xf]
    %v102 = vld [vmem:[%s2 + $0x4] sm:$0xf]
    %v103 = vld [vmem:[%s2 + $0x8] sm:$0xf]
    %v104 = vld [vmem:[%s2 + $0xc] sm:$0xf]
    %v105 = vld [vmem:[%s2 + $0x10] sm:$0xf]
    %v106 = vld [vmem:[%s2 + $0x14] sm:$0xf]
    %v107 = vld [vmem:[%s2 + $0x18] sm:$0xf]
    %v108 = vld [vmem:[%s2 + $0x1c] sm:$0xf]
    %v109 = vld [vmem:[%s2 + $0x20] sm:$0xf]
    %v110 = vld [vmem:[%s2 + $0x24] sm:$0xf]
    %v111 = vld [vmem:[%s2 + $0x28] sm:$0xf]
    %v112 = vld [vmem:[%s2 + $0x2c] sm:$0xf]
    %v113 = vld [vmem:[%s2 + $0x30] sm:$0xf]
    %v114 = vld [vmem:[%s2 + $0x34] sm:$0xf]
    %v115 = vld [vmem:[%s2 + $0x38] sm:$0xf]
    %v116 = vld [vmem:[%s2 + $0x3c] sm:$0xf]
    %v117 = vunpack.c.l.b16 %v50
    %v118 = vunpack.c.l.b16 %v60
    %v119 = vunpack.c.l.b16 %v74
    %v120 = vunpack.c.l.b16 %v84
    %v121 = vpack.c.b16 %v118, %v117
    %v122 = vpack.c.b16 %v120, %v119
    %v141 = vunpack.c.l.b16 %v101
    %v142 = vunpack.c.l.b16 %v102
    %v143 = vunpack.c.l.b16 %v103
    %v144 = vunpack.c.l.b16 %v104
    %v145 = vunpack.c.l.b16 %v105
    %v146 = vunpack.c.l.b16 %v106
    %v147 = vunpack.c.l.b16 %v107
    %v148 = vunpack.c.l.b16 %v108
    %v149 = vunpack.c.l.b16 %v109
    %v150 = vunpack.c.l.b16 %v110
    %v151 = vunpack.c.l.b16 %v111
    %v152 = vunpack.c.l.b16 %v112
    %v153 = vunpack.c.l.b16 %v113
    %v154 = vunpack.c.l.b16 %v114
    %v155 = vunpack.c.l.b16 %v115
    %v156 = vunpack.c.l.b16 %v116
    %v157 = vpack.c.b16 %v142, %v141
    %v158 = vpack.c.b16 %v144, %v143
    %v159 = vpack.c.b16 %v146, %v145
    %v160 = vpack.c.b16 %v148, %v147
    %v161 = vpack.c.b16 %v150, %v149
    %v162 = vpack.c.b16 %v152, %v151
    %v163 = vpack.c.b16 %v154, %v153
    %v164 = vpack.c.b16 %v156, %v155
    %173 = vmatprep.subr.bf16.mxu0 0
    %174 = vmatpush1.bf16.msra.mxu0 %v157
    %175 = vmatprep.subr.bf16.mxu0 0
    %176 = vmatpush1.bf16.msra.mxu0 %v158
    %177 = vmatprep.subr.bf16.mxu0 0
    %178 = vmatpush1.bf16.msra.mxu0 %v159
    %179 = vmatprep.subr.bf16.mxu0 0
    %180 = vmatpush1.bf16.msra.mxu0 %v160
    %181 = vmatprep.subr.bf16.mxu0 0
    %182 = vmatpush1.bf16.msra.mxu0 %v161
    %183 = vmatprep.subr.bf16.mxu0 0
    %184 = vmatpush1.bf16.msra.mxu0 %v162
    %185 = vmatprep.subr.bf16.mxu0 0
    %186 = vmatpush1.bf16.msra.mxu0 %v163
    %187 = vmatprep.subr.bf16.mxu0 0
    %188 = vmatpush1.bf16.msra.mxu0 %v164
    %189 = vmatprep.subr.bf16.mxu0 0
    %190 = vmatpush1.bf16.msra.mxu0 0
    %191 = vmatprep.subr.bf16.mxu0 0
    %192 = vmatpush1.bf16.msra.mxu0 0
    %193 = vmatprep.subr.bf16.mxu0 0
    %194 = vmatpush1.bf16.msra.mxu0 0
    %195 = vmatprep.subr.bf16.mxu0 0
    %196 = vmatpush1.bf16.msra.mxu0 0
    %197 = vmatprep.subr.bf16.mxu0 0
    %198 = vmatpush1.bf16.msra.mxu0 0
    %199 = vmatprep.subr.bf16.mxu0 0
    %200 = vmatpush1.bf16.msra.mxu0 0
    %201 = vmatprep.subr.bf16.mxu0 0
    %202 = vmatpush1.bf16.msra.mxu0 0
    %203 = vmatprep.subr.bf16.mxu0 0
    %204 = vmatpush1.bf16.msra.mxu0 0
    %205 = vmatprep.mubr.bf16.mxu0 0
    %206 = vmatmul.mubr.bf16.gmra.mrb[0].mxu0 %v121
    %v207 = vpop.f32.mrb[0].mxu0
    %v208 = vadd.f32 0.0, %v207
    %v209 = vpop.f32.mrb[0].mxu0
    %v210 = vpop.f32.mrb[0].mxu0
    %v211 = vadd.f32 0.0, %v210
    %v212 = vpop.f32.mrb[0].mxu0
    %213 = vmatprep.mubr.bf16.mxu0 0
    %214 = vmatmul.mubr.bf16.gmra.mrb[0].mxu0 %v122
    %v215 = vpop.f32.mrb[0].mxu0
    %v216 = vadd.f32 0.0, %v215
    %v217 = vpop.f32.mrb[0].mxu0
    %v218 = vpop.f32.mrb[0].mxu0
    %v219 = vadd.f32 0.0, %v218
    %v220 = vpop.f32.mrb[0].mxu0
    %221 = vdwg.mxu0
    %v226 = vunpack.c.l.b16 %v28
    %v227 = vunpack.c.l.b16 %v29
    %v228 = vunpack.c.l.b16 %v30
    %v229 = vunpack.c.l.b16 %v31
    %v230 = vpack.c.b16 %v227, %v226
    %v231 = vpack.c.b16 %v229, %v228
    %v250 = vunpack.c.l.b16 %v85
    %v251 = vunpack.c.l.b16 %v86
    %v252 = vunpack.c.l.b16 %v87
    %v253 = vunpack.c.l.b16 %v88
    %v254 = vunpack.c.l.b16 %v89
    %v255 = vunpack.c.l.b16 %v90
    %v256 = vunpack.c.l.b16 %v91
    %v257 = vunpack.c.l.b16 %v92
    %v258 = vunpack.c.l.b16 %v93
    %v259 = vunpack.c.l.b16 %v94
    %v260 = vunpack.c.l.b16 %v95
    %v261 = vunpack.c.l.b16 %v96
    %v262 = vunpack.c.l.b16 %v97
    %v263 = vunpack.c.l.b16 %v98
    %v264 = vunpack.c.l.b16 %v99
    %v265 = vunpack.c.l.b16 %v100
    %v266 = vpack.c.b16 %v251, %v250
    %v267 = vpack.c.b16 %v253, %v252
    %v268 = vpack.c.b16 %v255, %v254
    %v269 = vpack.c.b16 %v257, %v256
    %v270 = vpack.c.b16 %v259, %v258
    %v271 = vpack.c.b16 %v261, %v260
    %v272 = vpack.c.b16 %v263, %v262
    %v273 = vpack.c.b16 %v265, %v264
    %282 = vmatprep.subr.bf16.mxu0 0
    %283 = vmatpush1.bf16.msra.mxu0 %v266
    %284 = vmatprep.subr.bf16.mxu0 0
    %285 = vmatpush1.bf16.msra.mxu0 %v267
    %286 = vmatprep.subr.bf16.mxu0 0
    %287 = vmatpush1.bf16.msra.mxu0 %v268
    %288 = vmatprep.subr.bf16.mxu0 0
    %289 = vmatpush1.bf16.msra.mxu0 %v269
    %290 = vmatprep.subr.bf16.mxu0 0
    %291 = vmatpush1.bf16.msra.mxu0 %v270
    %292 = vmatprep.subr.bf16.mxu0 0
    %293 = vmatpush1.bf16.msra.mxu0 %v271
    %294 = vmatprep.subr.bf16.mxu0 0
    %295 = vmatpush1.bf16.msra.mxu0 %v272
    %296 = vmatprep.subr.bf16.mxu0 0
    %297 = vmatpush1.bf16.msra.mxu0 %v273
    %298 = vmatprep.subr.bf16.mxu0 0
    %299 = vmatpush1.bf16.msra.mxu0 0
    %300 = vmatprep.subr.bf16.mxu0 0
    %301 = vmatpush1.bf16.msra.mxu0 0
    %302 = vmatprep.subr.bf16.mxu0 0
    %303 = vmatpush1.bf16.msra.mxu0 0
    %304 = vmatprep.subr.bf16.mxu0 0
    %305 = vmatpush1.bf16.msra.mxu0 0
    %306 = vmatprep.subr.bf16.mxu0 0
    %307 = vmatpush1.bf16.msra.mxu0 0
    %308 = vmatprep.subr.bf16.mxu0 0
    %309 = vmatpush1.bf16.msra.mxu0 0
    %310 = vmatprep.subr.bf16.mxu0 0
    %311 = vmatpush1.bf16.msra.mxu0 0
    %312 = vmatprep.subr.bf16.mxu0 0
    %313 = vmatpush1.bf16.msra.mxu0 0
    %314 = vmatprep.mubr.bf16.mxu0 0
    %315 = vmatmul.mubr.bf16.gmra.mrb[0].mxu0 %v230
    %v316 = vpop.f32.mrb[0].mxu0
    %v317 = vadd.f32 %v208, %v316
    %v318 = vpop.f32.mrb[0].mxu0
    %v319 = vpop.f32.mrb[0].mxu0
    %v320 = vadd.f32 %v211, %v319
    %v321 = vpop.f32.mrb[0].mxu0
    %322 = vmatprep.mubr.bf16.mxu0 0
    %323 = vmatmul.mubr.bf16.gmra.mrb[0].mxu0 %v231
    %v324 = vpop.f32.mrb[0].mxu0
    %v325 = vadd.f32 %v216, %v324
    %v326 = vpop.f32.mrb[0].mxu0
    %v327 = vpop.f32.mrb[0].mxu0
    %v328 = vadd.f32 %v219, %v327
    %v329 = vpop.f32.mrb[0].mxu0
    %330 = vdwg.mxu0
    %v331 = vld [vmem:[%s3] sm:$0xff]
    %v332 = vld [vmem:[%s3 + $0x8] sm:$0xff]
    %v333 = vadd.f32 %v317, %v331
    %v334 = vadd.f32 %v320, %v332
    %v335 = vadd.f32 %v325, %v331
    %v336 = vadd.f32 %v328, %v332
    %v337 = vmax.f32 %v333, %v334
    %v338 = vrot.slane %v337, 4
    %v339 = vmax.f32 %v337, %v338
    %v340 = vrot.slane %v339, 2
    %v341 = vmax.f32 %v339, %v340
    %v342 = vrot.slane %v341, 1
    %v343 = vmax.f32 %v341, %v342
    %v344 = vmax.f32 %v335, %v336
    %v345 = vrot.slane %v344, 4
    %v346 = vmax.f32 %v344, %v345
    %v347 = vrot.slane %v346, 2
    %v348 = vmax.f32 %v346, %v347
    %v349 = vrot.slane %v348, 1
    %v350 = vmax.f32 %v348, %v349
    %353 = vrot.lane.b32.xlu0 %v343, 96
    %v354 = vpop.permute.xlu0 %353
    %355 = vrot.lane.b32.xlu0 %v350, 96
    %v356 = vpop.permute.xlu0 %355
    %v359 = vmax.f32 %v343, %v354
    %v360 = vmax.f32 %v350, %v356
    %363 = vrot.lane.b32.xlu0 %v359, 64
    %v364 = vpop.permute.xlu0 %363
    %365 = vrot.lane.b32.xlu0 %v360, 64
    %v366 = vpop.permute.xlu0 %365
    %v369 = vmax.f32 %v359, %v364
    %v370 = vmax.f32 %v360, %v366
    %v371 = vld [vmem:[%s4] sm:$0x1]
    %v373 = vlaneseq
    %v374 = vshrl.u32 %v373, 7
    %v375 = vsub.s32 0, %v374
    %v376 = vrot.slane %v371, %v375
    %v378 = vadd.f32 %v369, %v376
    %v379 = vadd.f32 %v370, %v376
    %v380 = vmax.f32 %v378, 0.0
    %v381 = vmax.f32 %v379, 0.0
    %v382 = vld [vmem:[%s5] sm:$0xff]
    %v383 = vld [vmem:[%s5 + $0x8] sm:$0xff]
    %v384 = vld [vmem:[%s5 + $0x10] sm:$0xff]
    %v385 = vld [vmem:[%s5 + $0x18] sm:$0xff]
    %v386 = vld [vmem:[%s5 + $0x20] sm:$0xff]
    %v387 = vld [vmem:[%s5 + $0x28] sm:$0xff]
    %v388 = vld [vmem:[%s5 + $0x30] sm:$0xff]
    %v389 = vld [vmem:[%s5 + $0x38] sm:$0xff]
    %v390 = vld [vmem:[%s6] sm:$0x3]
    %v392 = vlaneseq
    %v393 = vshrl.u32 %v392, 7
    %v394 = vsub.s32 0, %v393
    %v395 = vrot.slane %v390, %v394
    %v396 = vlaneseq
    %v397 = vshrl.u32 %v396, 7
    %v398 = vsub.s32 1, %v397
    %v399 = vrot.slane %v390, %v398
    %v404 = vrot.slane %v381, 7
    %vm405 = vcmask 1041409
    %v406 = vsel %vm405, %v404, %v380
    %vm407 = vcmask 261120
    %v408 = vsel %vm407, %v406, 0
    %410 = vmatprep.subr.mxu0 %v383
    %411 = vmatpush1.msra.mxu0 %v382
    %412 = vmatprep.subr.mxu0 %v385
    %413 = vmatpush1.msra.mxu0 %v384
    %414 = vmatprep.subr.mxu0 %v387
    %415 = vmatpush1.msra.mxu0 %v386
    %416 = vmatprep.subr.mxu0 %v389
    %417 = vmatpush1.msra.mxu0 %v388
    %418 = vmatprep.subr.mxu0 0.0
    %419 = vmatpush1.msra.mxu0 0.0
    %420 = vmatprep.subr.mxu0 0.0
    %421 = vmatpush1.msra.mxu0 0.0
    %422 = vmatprep.subr.mxu0 0.0
    %423 = vmatpush1.msra.mxu0 0.0
    %424 = vmatprep.subr.mxu0 0.0
    %425 = vmatpush1.msra.mxu0 0.0
    %426 = vmatprep.subr.mxu0 0.0
    %427 = vmatpush1.msra.mxu0 0.0
    %428 = vmatprep.subr.mxu0 0.0
    %429 = vmatpush1.msra.mxu0 0.0
    %430 = vmatprep.subr.mxu0 0.0
    %431 = vmatpush1.msra.mxu0 0.0
    %432 = vmatprep.subr.mxu0 0.0
    %433 = vmatpush1.msra.mxu0 0.0
    %434 = vmatprep.subr.mxu0 0.0
    %435 = vmatpush1.msra.mxu0 0.0
    %436 = vmatprep.subr.mxu0 0.0
    %437 = vmatpush1.msra.mxu0 0.0
    %438 = vmatprep.subr.mxu0 0.0
    %439 = vmatpush1.msra.mxu0 0.0
    %440 = vmatprep.subr.mxu0 0.0
    %441 = vmatpush1.msra.mxu0 0.0
    %442 = vmatprep.subr.mxu0 0.0
    %443 = vmatpush1.msra.mxu0 0.0
    %444 = vmatprep.subr.mxu0 0.0
    %445 = vmatpush1.msra.mxu0 0.0
    %446 = vmatprep.subr.mxu0 0.0
    %447 = vmatpush1.msra.mxu0 0.0
    %448 = vmatprep.subr.mxu0 0.0
    %449 = vmatpush1.msra.mxu0 0.0
    %450 = vmatprep.subr.mxu0 0.0
    %451 = vmatpush1.msra.mxu0 0.0
    %452 = vmatprep.subr.mxu0 0.0
    %453 = vmatpush1.msra.mxu0 0.0
    %454 = vmatprep.subr.mxu0 0.0
    %455 = vmatpush1.msra.mxu0 0.0
    %456 = vmatprep.subr.mxu0 0.0
    %457 = vmatpush1.msra.mxu0 0.0
    %458 = vmatprep.subr.mxu0 0.0
    %459 = vmatpush1.msra.mxu0 0.0
    %460 = vmatprep.subr.mxu0 0.0
    %461 = vmatpush1.msra.mxu0 0.0
    %462 = vmatprep.subr.mxu0 0.0
    %463 = vmatpush1.msra.mxu0 0.0
    %464 = vmatprep.subr.mxu0 0.0
    %465 = vmatpush1.msra.mxu0 0.0
    %466 = vmatprep.subr.mxu0 0.0
    %467 = vmatpush1.msra.mxu0 0.0
    %468 = vmatprep.subr.mxu0 0.0
    %469 = vmatpush1.msra.mxu0 0.0
    %470 = vmatprep.subr.mxu0 0.0
    %471 = vmatpush1.msra.mxu0 0.0
    %472 = vmatprep.subr.mxu0 0.0
    %473 = vmatpush1.msra.mxu0 0.0
    %474 = vmatprep.mubr.f32.mxu0 0.0
    %475 = vmatmul.mubr.f32.gmra.mrb[0].mxu0 %v408
    %v476 = vpop.f32.mrb[0].mxu0
    %v477 = vadd.f32 %v395, %v476
    %v478 = vpop.f32.mrb[0].mxu0
    %v479 = vadd.f32 %v399, %v478
    %480 = vdwg.mxu0
    %v483 = vcombine.low %v477, %v479
    %v485 = vunpack.c.l.s4 1983009808
    %v486 = vunpack.c.0.s8 %v485
    %v487 = vlaneseq
    %v488 = vshrl.u32 %v487, 7
    %v489 = vsub.s32 %v486, %v488
    %v490 = vrot.slane %v483, %v489
    %492 = vst [vmem:[#allocation2] sm:$0xf] %v490
    // Predicated region
    $region30: #{cnn_forward.1} parent=1 // pred_check
      _
    $region31: #{cnn_forward.1} parent=1 // pred_check_branch
      %494 = sbr.rel (0) target = $region33
    $region32: #{cnn_forward.1} parent=1 // pred_region
      %s496 = ssub.s32 64, 64
      %497 = vsyncadd [#allocation3], %s496
      %s499 = sshll.u32 [#allocation2], 4
      %s500 = int_to_ptr.vmem [resolvable:$true] %s499
      %502 = dma.vmem_to_hbm [thread:$0]  %s500, 64, %s7, [#allocation3]
    $region33: #{cnn_forward.1} parent=1 // pred_fallthru
      _
    // Predicated region
    $region34: #{cnn_forward.1} parent=1 // pred_check
      _
    $region35: #{cnn_forward.1} parent=1 // pred_check_branch
      %504 = sbr.rel (0) target = $region37
    $region36: #{cnn_forward.1} parent=1 // pred_region
      %505 = dma.done [#allocation3], 64
    $region37: #{cnn_forward.1} parent=1 // pred_fallthru
      _
    %506 = vsyncpa [#allocation3], 1

</llo_original>
